<compile_context>
chip_gen: v7x
topology: tpu7x:2x2x1
jax: 0.10.0
libtpu: 0.0.40
codegen_flags: <defaults>
</compile_context>

<pallas_src>
import jax
import jax.numpy as jnp
from jax.experimental import pallas as pl
from jax.experimental.pallas import tpu as pltpu


def mep_link_decoder_kernel(
    dirs_ref, gpre_ref,
    lw1d_ref, lw1v_ref, lb1_ref, lw2_ref, lb2_ref, lw3_ref, lb3_ref,
    lw4_ref, lb4_ref,
    mw1l_ref, mb1_ref, mw2_ref, mb2_ref,
    out_ref,
):
    f32 = jnp.float32
    bf16 = jnp.bfloat16

    # --- per-edge geometric features, all (rows, tm) lane-dense ---
    d = dirs_ref[...]                                           # (3, tm) f32
    dist_sq = (d[0:1, :] * d[0:1, :]
               + d[1:2, :] * d[1:2, :]
               + d[2:3, :] * d[2:3, :])                         # (1, tm), no XLU reduce
    dist = jnp.sqrt(dist_sq)                                    # (1, tm)
    inv = pl.reciprocal(dist + 1e-8, approx=True)               # EUP, not a VALU divide
    dn = d * inv                                                # (3, tm) normalized dirs

    # --- link_lin MLP (transposed, bf16 MXU operands, f32 accum) ---
    # lw1d already has 1/max_distance folded in (wrapper), so no per-edge rescale.
    h = (jnp.dot(lw1v_ref[...], dn.astype(bf16),
                 preferred_element_type=f32)                    # (16, 3) @ (3, tm)
         + lw1d_ref[...] * dist                                 # (16, 1) * (1, tm)
         + lb1_ref[...])                                        # (16, tm)
    h = jnp.maximum(h, 0.0)
    h = jnp.maximum(jnp.dot(lw2_ref[...], h.astype(bf16),
                            preferred_element_type=f32) + lb2_ref[...], 0.0)   # (32, tm)
    h = jnp.maximum(jnp.dot(lw3_ref[...], h.astype(bf16),
                            preferred_element_type=f32) + lb3_ref[...], 0.0)   # (16, tm)
    link_emb = (jnp.dot(lw4_ref[...], h.astype(bf16),
                        preferred_element_type=f32) + lb4_ref[...])            # (1, tm)

    # --- main MLP: first layer prefused per node in the wrapper; only the link
    #     column, bias, ReLU and the second layer remain in-kernel.
    g = gpre_ref[...].astype(f32) + mw1l_ref[...] * link_emb + mb1_ref[...]    # (E, tm)
    g = jnp.maximum(g, 0.0)
    out = (jnp.dot(mw2_ref[...], g.astype(bf16),
                   preferred_element_type=f32) + mb2_ref[...])                 # (out_ch, tm)
    out_ref[...] = out.astype(out_ref.dtype)


def mep_link_decoder(pos, z, edge_label_index, params, *, tm=8192):
    E = z.shape[1]
    M = edge_label_index.shape[1]
    (lw1, lb1, lw2, lb2, lw3, lb3, lw4, lb4, mw1, mb1, mw2, mb2) = params
    out_ch = mw2.shape[1]

    idx0 = edge_label_index[0]
    idx1 = edge_label_index[1]

    # --- geometry: gather from a pre-transposed (3, N) pos table (no (M,3)->(3,M) pass)
    posT = pos.T.astype(jnp.float32)                                        # (3, N), tiny
    dirs_T = jnp.take(posT, idx1, axis=1) - jnp.take(posT, idx0, axis=1)    # (3, M)

    min_xyz = jnp.min(pos, axis=0)
    max_xyz = jnp.max(pos, axis=0)
    max_distance = jnp.sqrt(jnp.sum((max_xyz - min_xyz) ** 2))

    # --- main-MLP first layer, prefused per node (O(N*E^2), negligible vs M) ---
    # za = z @ Wa, zb = z @ Wb computed in f32, gathered from the transposed (E, N)
    # tables and summed; the (E, M) bf16 slab goes straight into the kernel.
    zaT = (z.astype(jnp.float32) @ mw1[0:E, :]).T                           # (E, N)
    zbT = (z.astype(jnp.float32) @ mw1[E:2 * E, :]).T                       # (E, N)
    gpre_T = (jnp.take(zaT, idx0, axis=1)
              + jnp.take(zbT, idx1, axis=1)).astype(jnp.bfloat16)           # (E, M)

    # --- weight re-layout: transposed, bf16 matmul operands, f32 biases ---
    lw1d = (lw1[0:1, :].T / max_distance).astype(jnp.float32)   # (16, 1), 1/max_dist folded
    lw1v = lw1[1:4, :].T.astype(jnp.bfloat16)                   # (16, 3)
    lb1t = lb1.T                                                # (16, 1)
    lw2t, lb2t = lw2.T.astype(jnp.bfloat16), lb2.T              # (32, 16), (32, 1)
    lw3t, lb3t = lw3.T.astype(jnp.bfloat16), lb3.T              # (16, 32), (16, 1)
    lw4t, lb4t = lw4.T.astype(jnp.bfloat16), lb4.T              # (1, 16),  (1, 1)
    mw1l = mw1[2 * E:2 * E + 1, :].T                            # (E, 1) f32 link column
    mb1t = mb1.T                                                # (E, 1)
    mw2t = mw2.T.astype(jnp.bfloat16)                           # (out_ch, E)
    mb2t = mb2.T                                                # (out_ch, 1)

    # --- edge tiling: big lane-dense tiles; even grid (>=2 steps) for v7x's 2 TCs ---
    m_lanes = pl.cdiv(M, 128)
    tm_lanes = max(1, min(tm // 128, m_lanes))
    steps = pl.cdiv(m_lanes, tm_lanes)
    if steps % 2 == 1 and m_lanes > 1:
        steps += 1
    tm_lanes = pl.cdiv(m_lanes, steps)
    tile = tm_lanes * 128
    m_pad = steps * tile
    if m_pad != M:
        # nonzero sentinel so padded columns never hit reciprocal(~1e-8)
        dirs_T = jnp.pad(dirs_T, ((0, 0), (0, m_pad - M)), constant_values=1.0)
        gpre_T = jnp.pad(gpre_T, ((0, 0), (0, m_pad - M)))

    def full_spec(a):
        return pl.BlockSpec(a.shape, lambda i: (0,) * a.ndim)

    def edge_spec(rows):
        return pl.BlockSpec((rows, tile), lambda i: (0, i))

    weights = (lw1d, lw1v, lb1t, lw2t, lb2t, lw3t, lb3t, lw4t, lb4t,
               mw1l, mb1t, mw2t, mb2t)

    out_t = pl.pallas_call(
        mep_link_decoder_kernel,
        out_shape=jax.ShapeDtypeStruct((out_ch, m_pad), jnp.float32),
        grid_spec=pltpu.PrefetchScalarGridSpec(
            num_scalar_prefetch=0,
            grid=(steps,),
            in_specs=[edge_spec(3), edge_spec(E)]
                     + [full_spec(w) for w in weights],
            out_specs=edge_spec(out_ch),
        ),
        # Per-step VMEM at tile=8192, E=32: ~2.3 MB double-buffered I/O + ~3 MB f32
        # temporaries -> well under the default scoped limit on all generations, so
        # no explicit vmem_limit_bytes is needed at the default tile.
        compiler_params=pltpu.CompilerParams(dimension_semantics=("parallel",)),
    )(dirs_T, gpre_T, *weights)

    return out_t[:, :M].T                                       # (M, out_ch)


# --------------------- parameter init (deterministic) ---------------------

def _init_linear(key, fan_in, fan_out):
    kw, kb = jax.random.split(key)
    bound = 1.0 / jnp.sqrt(jnp.float32(fan_in))
    w = jax.random.uniform(kw, (fan_in, fan_out), jnp.float32, -bound, bound)
    b = jax.random.uniform(kb, (1, fan_out), jnp.float32, -bound, bound)
    return w, b


def init_params(key, embedding_channels, output_channels=1):
    link_dims = [4, 16, 32, 16, 1]
    main_dims = [2 * embedding_channels + 1, embedding_channels, output_channels]
    keys = jax.random.split(key, len(link_dims) - 1 + len(main_dims) - 1)
    params = []
    ki = 0
    for i in range(len(link_dims) - 1):
        w, b = _init_linear(keys[ki], link_dims[i], link_dims[i + 1]); ki += 1
        params += [w, b]
    for i in range(len(main_dims) - 1):
        w, b = _init_linear(keys[ki], main_dims[i], main_dims[i + 1]); ki += 1
        params += [w, b]
    return tuple(params)


# --------------------------- pure-JAX reference ---------------------------

def reference(pos, z, eli, params):
    (lw1, lb1, lw2, lb2, lw3, lb3, lw4, lb4, mw1, mb1, mw2, mb2) = params
    start, end = pos[eli[0]], pos[eli[1]]
    min_xyz = jnp.min(pos, axis=0)
    max_xyz = jnp.max(pos, axis=0)
    directions = end - start
    distances = jnp.sqrt(jnp.sum(directions ** 2, axis=1)).reshape(-1, 1)
    directions_normed = directions / (distances + 1e-8)
    max_distance = jnp.sqrt(jnp.sum((max_xyz - min_xyz) ** 2))
    distances = distances / max_distance
    link_feat = jnp.concatenate([distances, directions_normed], axis=-1)

    h = link_feat
    for w, b in [(lw1, lb1), (lw2, lb2), (lw3, lb3)]:
        h = jnp.maximum(h @ w + b, 0.0)
    link_emb = h @ lw4 + lb4

    x = jnp.concatenate([z[eli[0]], z[eli[1]], link_emb], axis=-1)
    x = jnp.maximum(x @ mw1 + mb1, 0.0)
    return x @ mw2 + mb2


if __name__ == "__main__":
    E = 32          # embedding_channels
    OUT = 1         # output_channels
    N = 64          # number of nodes
    M = 200         # number of candidate links (non-multiple of 128 -> tests padding)

    key = jax.random.PRNGKey(0)
    kp, kz, kpos, ke0, ke1 = jax.random.split(key, 5)

    params = init_params(kp, E, OUT)
    pos = jax.random.normal(kpos, (N, 3), jnp.float32) * 5.0
    z = jax.random.normal(kz, (N, E), jnp.float32)
    edge_label_index = jnp.stack([
        jax.random.randint(ke0, (M,), 0, N),
        jax.random.randint(ke1, (M,), 0, N),
    ], axis=0).astype(jnp.int32)

    fwd = jax.jit(lambda p, zz, eli, prm: mep_link_decoder(p, zz, eli, prm))
    out = fwd(pos, z, edge_label_index, params)
    out = jax.block_until_ready(out)

    ref = reference(pos, z, edge_label_index, params)
    assert out.shape == (M, OUT)
    assert jnp.allclose(out, ref, rtol=1e-2, atol=5e-2), "mismatch vs reference"

    print("KERNEL_OK")
</pallas_src>

<mosaic_0001>
module attributes {stable_mosaic.version = 11 : i64} {
  func.func @mep_link_decoder_kernel(%arg0: i32, %arg1: memref<3x128xf32, #tpu.memory_space<vmem>>, %arg2: memref<32x128xbf16, #tpu.memory_space<vmem>>, %arg3: memref<16x1xf32, #tpu.memory_space<vmem>>, %arg4: memref<16x3xbf16, #tpu.memory_space<vmem>>, %arg5: memref<16x1xf32, #tpu.memory_space<vmem>>, %arg6: memref<32x16xbf16, #tpu.memory_space<vmem>>, %arg7: memref<32x1xf32, #tpu.memory_space<vmem>>, %arg8: memref<16x32xbf16, #tpu.memory_space<vmem>>, %arg9: memref<16x1xf32, #tpu.memory_space<vmem>>, %arg10: memref<1x16xbf16, #tpu.memory_space<vmem>>, %arg11: memref<1x1xf32, #tpu.memory_space<vmem>>, %arg12: memref<32x1xf32, #tpu.memory_space<vmem>>, %arg13: memref<32x1xf32, #tpu.memory_space<vmem>>, %arg14: memref<1x32xbf16, #tpu.memory_space<vmem>>, %arg15: memref<1x1xf32, #tpu.memory_space<vmem>>, %arg16: memref<1x128xf32, #tpu.memory_space<vmem>>) attributes {dimension_semantics = [#tpu.dimension_semantics<parallel>], iteration_bounds = array<i64: 2>, scalar_prefetch = 0 : i64, scratch_operands = 0 : i64, tpu.core_type = #tpu.core_type<tc>, window_params = [{transform_indices = @transform_0, window_bounds = array<i64: 3, 128>}, {transform_indices = @transform_1, window_bounds = array<i64: 32, 128>}, {pipeline_mode = #tpu.pipeline_mode<synchronous>, transform_indices = @transform_2, window_bounds = array<i64: 16, 1>}, {pipeline_mode = #tpu.pipeline_mode<synchronous>, transform_indices = @transform_3, window_bounds = array<i64: 16, 3>}, {pipeline_mode = #tpu.pipeline_mode<synchronous>, transform_indices = @transform_4, window_bounds = array<i64: 16, 1>}, {pipeline_mode = #tpu.pipeline_mode<synchronous>, transform_indices = @transform_5, window_bounds = array<i64: 32, 16>}, {pipeline_mode = #tpu.pipeline_mode<synchronous>, transform_indices = @transform_6, window_bounds = array<i64: 32, 1>}, {pipeline_mode = #tpu.pipeline_mode<synchronous>, transform_indices = @transform_7, window_bounds = array<i64: 16, 32>}, {pipeline_mode = #tpu.pipeline_mode<synchronous>, transform_indices = @transform_8, window_bounds = array<i64: 16, 1>}, {pipeline_mode = #tpu.pipeline_mode<synchronous>, transform_indices = @transform_9, window_bounds = array<i64: 1, 16>}, {pipeline_mode = #tpu.pipeline_mode<synchronous>, transform_indices = @transform_10, window_bounds = array<i64: 1, 1>}, {pipeline_mode = #tpu.pipeline_mode<synchronous>, transform_indices = @transform_11, window_bounds = array<i64: 32, 1>}, {pipeline_mode = #tpu.pipeline_mode<synchronous>, transform_indices = @transform_12, window_bounds = array<i64: 32, 1>}, {pipeline_mode = #tpu.pipeline_mode<synchronous>, transform_indices = @transform_13, window_bounds = array<i64: 1, 32>}, {pipeline_mode = #tpu.pipeline_mode<synchronous>, transform_indices = @transform_14, window_bounds = array<i64: 1, 1>}, {transform_indices = @transform_15, window_bounds = array<i64: 1, 128>}]} {
    %c0 = arith.constant 0 : index
    %c0_0 = arith.constant 0 : index
    %0 = vector.load %arg1[%c0, %c0_0] : memref<3x128xf32, #tpu.memory_space<vmem>>, vector<3x128xf32>
    %1 = vector.extract_strided_slice %0 {offsets = [0, 0], sizes = [1, 128], strides = [1, 1]} : vector<3x128xf32> to vector<1x128xf32>
    %2 = vector.extract_strided_slice %0 {offsets = [0, 0], sizes = [1, 128], strides = [1, 1]} : vector<3x128xf32> to vector<1x128xf32>
    %3 = arith.mulf %1, %2 : vector<1x128xf32>
    %4 = vector.extract_strided_slice %0 {offsets = [1, 0], sizes = [1, 128], strides = [1, 1]} : vector<3x128xf32> to vector<1x128xf32>
    %5 = vector.extract_strided_slice %0 {offsets = [1, 0], sizes = [1, 128], strides = [1, 1]} : vector<3x128xf32> to vector<1x128xf32>
    %6 = arith.mulf %4, %5 : vector<1x128xf32>
    %7 = arith.addf %3, %6 : vector<1x128xf32>
    %8 = vector.extract_strided_slice %0 {offsets = [2, 0], sizes = [1, 128], strides = [1, 1]} : vector<3x128xf32> to vector<1x128xf32>
    %9 = vector.extract_strided_slice %0 {offsets = [2, 0], sizes = [1, 128], strides = [1, 1]} : vector<3x128xf32> to vector<1x128xf32>
    %10 = arith.mulf %8, %9 : vector<1x128xf32>
    %11 = arith.addf %7, %10 : vector<1x128xf32>
    %12 = math.sqrt %11 : vector<1x128xf32>
    %cst = arith.constant 9.99999993E-9 : f32
    %13 = vector.broadcast %cst : f32 to vector<1x128xf32>
    %14 = arith.addf %12, %13 : vector<1x128xf32>
    %15 = tpu.reciprocal %14 {approx = true} : vector<1x128xf32> -> vector<1x128xf32>
    %16 = vector.broadcast %15 : vector<1x128xf32> to vector<3x128xf32>
    %17 = arith.mulf %0, %16 : vector<3x128xf32>
    %c0_1 = arith.constant 0 : index
    %c0_2 = arith.constant 0 : index
    %18 = vector.load %arg4[%c0_1, %c0_2] : memref<16x3xbf16, #tpu.memory_space<vmem>>, vector<16x3xbf16>
    %19 = arith.truncf %17 : vector<3x128xf32> to vector<3x128xbf16>
    %cst_3 = arith.constant dense<0.000000e+00> : vector<16x128xf32>
    %20 = tpu.matmul %18, %19, %cst_3 {dimension_numbers = #tpu.dot_dimension_numbers<[1], [0], [0], [1], [0, 0, 1, 1], [], []>} : vector<16x3xbf16>, vector<3x128xbf16>, vector<16x128xf32> -> vector<16x128xf32>
    %c0_4 = arith.constant 0 : index
    %c0_5 = arith.constant 0 : index
    %21 = vector.load %arg3[%c0_4, %c0_5] : memref<16x1xf32, #tpu.memory_space<vmem>>, vector<16x1xf32>
    %22 = vector.broadcast %21 : vector<16x1xf32> to vector<16x128xf32>
    %23 = vector.broadcast %12 : vector<1x128xf32> to vector<16x128xf32>
    %24 = arith.mulf %22, %23 : vector<16x128xf32>
    %25 = arith.addf %20, %24 : vector<16x128xf32>
    %c0_6 = arith.constant 0 : index
    %c0_7 = arith.constant 0 : index
    %26 = vector.load %arg5[%c0_6, %c0_7] : memref<16x1xf32, #tpu.memory_space<vmem>>, vector<16x1xf32>
    %27 = vector.broadcast %26 : vector<16x1xf32> to vector<16x128xf32>
    %28 = arith.addf %25, %27 : vector<16x128xf32>
    %cst_8 = arith.constant 0.000000e+00 : f32
    %29 = vector.broadcast %cst_8 : f32 to vector<16x128xf32>
    %30 = arith.maximumf %28, %29 : vector<16x128xf32>
    %c0_9 = arith.constant 0 : index
    %c0_10 = arith.constant 0 : index
    %31 = vector.load %arg6[%c0_9, %c0_10] : memref<32x16xbf16, #tpu.memory_space<vmem>>, vector<32x16xbf16>
    %32 = arith.truncf %30 : vector<16x128xf32> to vector<16x128xbf16>
    %cst_11 = arith.constant dense<0.000000e+00> : vector<32x128xf32>
    %33 = tpu.matmul %31, %32, %cst_11 {dimension_numbers = #tpu.dot_dimension_numbers<[1], [0], [0], [1], [0, 0, 1, 1], [], []>} : vector<32x16xbf16>, vector<16x128xbf16>, vector<32x128xf32> -> vector<32x128xf32>
    %c0_12 = arith.constant 0 : index
    %c0_13 = arith.constant 0 : index
    %34 = vector.load %arg7[%c0_12, %c0_13] : memref<32x1xf32, #tpu.memory_space<vmem>>, vector<32x1xf32>
    %35 = vector.broadcast %34 : vector<32x1xf32> to vector<32x128xf32>
    %36 = arith.addf %33, %35 : vector<32x128xf32>
    %cst_14 = arith.constant 0.000000e+00 : f32
    %37 = vector.broadcast %cst_14 : f32 to vector<32x128xf32>
    %38 = arith.maximumf %36, %37 : vector<32x128xf32>
    %c0_15 = arith.constant 0 : index
    %c0_16 = arith.constant 0 : index
    %39 = vector.load %arg8[%c0_15, %c0_16] : memref<16x32xbf16, #tpu.memory_space<vmem>>, vector<16x32xbf16>
    %40 = arith.truncf %38 : vector<32x128xf32> to vector<32x128xbf16>
    %cst_17 = arith.constant dense<0.000000e+00> : vector<16x128xf32>
    %41 = tpu.matmul %39, %40, %cst_17 {dimension_numbers = #tpu.dot_dimension_numbers<[1], [0], [0], [1], [0, 0, 1, 1], [], []>} : vector<16x32xbf16>, vector<32x128xbf16>, vector<16x128xf32> -> vector<16x128xf32>
    %c0_18 = arith.constant 0 : index
    %c0_19 = arith.constant 0 : index
    %42 = vector.load %arg9[%c0_18, %c0_19] : memref<16x1xf32, #tpu.memory_space<vmem>>, vector<16x1xf32>
    %43 = vector.broadcast %42 : vector<16x1xf32> to vector<16x128xf32>
    %44 = arith.addf %41, %43 : vector<16x128xf32>
    %cst_20 = arith.constant 0.000000e+00 : f32
    %45 = vector.broadcast %cst_20 : f32 to vector<16x128xf32>
    %46 = arith.maximumf %44, %45 : vector<16x128xf32>
    %c0_21 = arith.constant 0 : index
    %c0_22 = arith.constant 0 : index
    %47 = vector.load %arg10[%c0_21, %c0_22] : memref<1x16xbf16, #tpu.memory_space<vmem>>, vector<1x16xbf16>
    %48 = arith.truncf %46 : vector<16x128xf32> to vector<16x128xbf16>
    %cst_23 = arith.constant dense<0.000000e+00> : vector<1x128xf32>
    %49 = tpu.matmul %47, %48, %cst_23 {dimension_numbers = #tpu.dot_dimension_numbers<[1], [0], [0], [1], [0, 0, 1, 1], [], []>} : vector<1x16xbf16>, vector<16x128xbf16>, vector<1x128xf32> -> vector<1x128xf32>
    %c0_24 = arith.constant 0 : index
    %c0_25 = arith.constant 0 : index
    %50 = vector.load %arg11[%c0_24, %c0_25] : memref<1x1xf32, #tpu.memory_space<vmem>>, vector<1x1xf32>
    %51 = vector.broadcast %50 : vector<1x1xf32> to vector<1x128xf32>
    %52 = arith.addf %49, %51 : vector<1x128xf32>
    %c0_26 = arith.constant 0 : index
    %c0_27 = arith.constant 0 : index
    %53 = vector.load %arg2[%c0_26, %c0_27] : memref<32x128xbf16, #tpu.memory_space<vmem>>, vector<32x128xbf16>
    %54 = arith.extf %53 : vector<32x128xbf16> to vector<32x128xf32>
    %c0_28 = arith.constant 0 : index
    %c0_29 = arith.constant 0 : index
    %55 = vector.load %arg12[%c0_28, %c0_29] : memref<32x1xf32, #tpu.memory_space<vmem>>, vector<32x1xf32>
    %56 = vector.broadcast %55 : vector<32x1xf32> to vector<32x128xf32>
    %57 = vector.broadcast %52 : vector<1x128xf32> to vector<32x128xf32>
    %58 = arith.mulf %56, %57 : vector<32x128xf32>
    %59 = arith.addf %54, %58 : vector<32x128xf32>
    %c0_30 = arith.constant 0 : index
    %c0_31 = arith.constant 0 : index
    %60 = vector.load %arg13[%c0_30, %c0_31] : memref<32x1xf32, #tpu.memory_space<vmem>>, vector<32x1xf32>
    %61 = vector.broadcast %60 : vector<32x1xf32> to vector<32x128xf32>
    %62 = arith.addf %59, %61 : vector<32x128xf32>
    %cst_32 = arith.constant 0.000000e+00 : f32
    %63 = vector.broadcast %cst_32 : f32 to vector<32x128xf32>
    %64 = arith.maximumf %62, %63 : vector<32x128xf32>
    %c0_33 = arith.constant 0 : index
    %c0_34 = arith.constant 0 : index
    %65 = vector.load %arg14[%c0_33, %c0_34] : memref<1x32xbf16, #tpu.memory_space<vmem>>, vector<1x32xbf16>
    %66 = arith.truncf %64 : vector<32x128xf32> to vector<32x128xbf16>
    %cst_35 = arith.constant dense<0.000000e+00> : vector<1x128xf32>
    %67 = tpu.matmul %65, %66, %cst_35 {dimension_numbers = #tpu.dot_dimension_numbers<[1], [0], [0], [1], [0, 0, 1, 1], [], []>} : vector<1x32xbf16>, vector<32x128xbf16>, vector<1x128xf32> -> vector<1x128xf32>
    %c0_36 = arith.constant 0 : index
    %c0_37 = arith.constant 0 : index
    %68 = vector.load %arg15[%c0_36, %c0_37] : memref<1x1xf32, #tpu.memory_space<vmem>>, vector<1x1xf32>
    %69 = vector.broadcast %68 : vector<1x1xf32> to vector<1x128xf32>
    %70 = arith.addf %67, %69 : vector<1x128xf32>
    %c0_38 = arith.constant 0 : index
    %c0_39 = arith.constant 0 : index
    %71 = vector.load %arg16[%c0_38, %c0_39] : memref<1x128xf32, #tpu.memory_space<vmem>>, vector<1x128xf32>
    tpu.vector_store %arg16[%c0_38, %c0_39], %70 {strides = array<i32>} : memref<1x128xf32, #tpu.memory_space<vmem>>, vector<1x128xf32>,
    return
  }
  func.func @transform_0(%arg0: i32) -> (i32, i32) {
    %c0_i32 = arith.constant 0 : i32
    %c0_i32_0 = arith.constant 0 : i32
    return %c0_i32, %arg0 : i32, i32
  }
  func.func @transform_1(%arg0: i32) -> (i32, i32) {
    %c0_i32 = arith.constant 0 : i32
    %c0_i32_0 = arith.constant 0 : i32
    return %c0_i32, %arg0 : i32, i32
  }
  func.func @transform_2(%arg0: i32) -> (i32, i32) {
    %c0_i32 = arith.constant 0 : i32
    %c0_i32_0 = arith.constant 0 : i32
    %c0_i32_1 = arith.constant 0 : i32
    return %c0_i32, %c0_i32_0 : i32, i32
  }
  func.func @transform_3(%arg0: i32) -> (i32, i32) {
    %c0_i32 = arith.constant 0 : i32
    %c0_i32_0 = arith.constant 0 : i32
    %c0_i32_1 = arith.constant 0 : i32
    return %c0_i32, %c0_i32_0 : i32, i32
  }
  func.func @transform_4(%arg0: i32) -> (i32, i32) {
    %c0_i32 = arith.constant 0 : i32
    %c0_i32_0 = arith.constant 0 : i32
    %c0_i32_1 = arith.constant 0 : i32
    return %c0_i32, %c0_i32_0 : i32, i32
  }
  func.func @transform_5(%arg0: i32) -> (i32, i32) {
    %c0_i32 = arith.constant 0 : i32
    %c0_i32_0 = arith.constant 0 : i32
    %c0_i32_1 = arith.constant 0 : i32
    return %c0_i32, %c0_i32_0 : i32, i32
  }
  func.func @transform_6(%arg0: i32) -> (i32, i32) {
    %c0_i32 = arith.constant 0 : i32
    %c0_i32_0 = arith.constant 0 : i32
    %c0_i32_1 = arith.constant 0 : i32
    return %c0_i32, %c0_i32_0 : i32, i32
  }
  func.func @transform_7(%arg0: i32) -> (i32, i32) {
    %c0_i32 = arith.constant 0 : i32
    %c0_i32_0 = arith.constant 0 : i32
    %c0_i32_1 = arith.constant 0 : i32
    return %c0_i32, %c0_i32_0 : i32, i32
  }
  func.func @transform_8(%arg0: i32) -> (i32, i32) {
    %c0_i32 = arith.constant 0 : i32
    %c0_i32_0 = arith.constant 0 : i32
    %c0_i32_1 = arith.constant 0 : i32
    return %c0_i32, %c0_i32_0 : i32, i32
  }
  func.func @transform_9(%arg0: i32) -> (i32, i32) {
    %c0_i32 = arith.constant 0 : i32
    %c0_i32_0 = arith.constant 0 : i32
    %c0_i32_1 = arith.constant 0 : i32
    return %c0_i32, %c0_i32_0 : i32, i32
  }
  func.func @transform_10(%arg0: i32) -> (i32, i32) {
    %c0_i32 = arith.constant 0 : i32
    %c0_i32_0 = arith.constant 0 : i32
    %c0_i32_1 = arith.constant 0 : i32
    return %c0_i32, %c0_i32_0 : i32, i32
  }
  func.func @transform_11(%arg0: i32) -> (i32, i32) {
    %c0_i32 = arith.constant 0 : i32
    %c0_i32_0 = arith.constant 0 : i32
    %c0_i32_1 = arith.constant 0 : i32
    return %c0_i32, %c0_i32_0 : i32, i32
  }
  func.func @transform_12(%arg0: i32) -> (i32, i32) {
    %c0_i32 = arith.constant 0 : i32
    %c0_i32_0 = arith.constant 0 : i32
    %c0_i32_1 = arith.constant 0 : i32
    return %c0_i32, %c0_i32_0 : i32, i32
  }
  func.func @transform_13(%arg0: i32) -> (i32, i32) {
    %c0_i32 = arith.constant 0 : i32
    %c0_i32_0 = arith.constant 0 : i32
    %c0_i32_1 = arith.constant 0 : i32
    return %c0_i32, %c0_i32_0 : i32, i32
  }
  func.func @transform_14(%arg0: i32) -> (i32, i32) {
    %c0_i32 = arith.constant 0 : i32
    %c0_i32_0 = arith.constant 0 : i32
    %c0_i32_1 = arith.constant 0 : i32
    return %c0_i32, %c0_i32_0 : i32, i32
  }
  func.func @transform_15(%arg0: i32) -> (i32, i32) {
    %c0_i32 = arith.constant 0 : i32
    %c0_i32_0 = arith.constant 0 : i32
    return %c0_i32, %arg0 : i32, i32
  }
}

</mosaic_0001>

<llo_original>
// kernel: _lambda_.1
$region0: #{_lambda_.1}
  #allocation0 [shape = 'u32[]', space=smem, size = 0x4, offset = 0x4, fixed_abs, tag = 'smem constant byte address 0x4 - core index']
  #allocation1 [shape = 'u32[144,128]{1,0:T(1,128)}', space=vmem, size = 0x12000, scoped, tag = 'internal scratch']
  #allocation2 [shape = 'f32[1,1]{1,0:T(1,128)S(1)}', space=vmem, size = 0x200, scoped, tag = 'scoped memory for _lambda_.1']
  #allocation3 [shape = 'f32[1,1]{1,0:T(1,128)S(1)}', space=vmem, size = 0x200, scoped, tag = 'scoped memory for _lambda_.1']
  %s0 = inlined_call_operand.vmem [shape: f32[3,256], index: 0, kind: input, shape index: {}]
  %s1 = inlined_call_operand.vmem [shape: bf16[32,256], index: 1, kind: input, shape index: {}]
  %s2 = inlined_call_operand.vmem [shape: f32[16,1], index: 2, kind: input, shape index: {}]
  %s3 = inlined_call_operand.vmem [shape: bf16[16,3], index: 3, kind: input, shape index: {}]
  %s4 = inlined_call_operand.vmem [shape: f32[16,1], index: 4, kind: input, shape index: {}]
  %s5 = inlined_call_operand.vmem [shape: bf16[32,16], index: 5, kind: input, shape index: {}]
  %s6 = inlined_call_operand.vmem [shape: f32[32,1], index: 6, kind: input, shape index: {}]
  %s7 = inlined_call_operand.vmem [shape: bf16[16,32], index: 7, kind: input, shape index: {}]
  %s8 = inlined_call_operand.vmem [shape: f32[16,1], index: 8, kind: input, shape index: {}]
  %s9 = inlined_call_operand.vmem [shape: bf16[1,16], index: 9, kind: input, shape index: {}]
  %s10 = inlined_call_operand.<no memory space> [shape: f32[1,1], index: 10, kind: input, shape index: {}]
  %s11 = inlined_call_operand.vmem [shape: f32[32,1], index: 11, kind: input, shape index: {}]
  %s12 = inlined_call_operand.vmem [shape: f32[32,1], index: 12, kind: input, shape index: {}]
  %s13 = inlined_call_operand.vmem [shape: bf16[1,32], index: 13, kind: input, shape index: {}]
  %s14 = inlined_call_operand.<no memory space> [shape: f32[1,1], index: 14, kind: input, shape index: {}]
  %s15 = inlined_call_operand.vmem [shape: f32[1,256], index: 15, kind: output, shape index: {}]
  %s16 = sld [smem:[#allocation0]]
  $region134: #{_lambda_.1} parent=0
    _
  %s18 = ssub.s32 1, %s16
  %s19 = scalar_select 0, %s18, %s16
  %v20 = vstv %s10
  %21 = vst [vmem:[#allocation2] sm:$0x1] %v20
  %v22 = vstv %s14
  %23 = vst [vmem:[#allocation3] sm:$0x1] %v22
  $region1: #{_lambda_.1} parent=0
    #allocation4 [shape = 'u8[16384]{0}', space=vmem, size = 0x4000, scoped, tag = 'input window, operand 1']
    loop: start=0, step=1, limit=4
    $region2: #{_lambda_.1} parent=1 // loop_pre_header
      _
    $region3: #{_lambda_.1} parent=1 // loop_header
      %s25 = sphi 0, %s29
      %p26 = scmp.ge.s32.totalorder %s25, 4
      %s35 = sphi 0, %s37
      %s38 = sphi 0, %s35
      %s39 = sphi 0, %s38
      %s55 = sphi 0, %s39
      %s61 = sphi 0, %s63
      %s64 = sphi 0, %s61
      %s65 = sphi 0, %s64
      %s81 = sphi 0, %s65
      %s85 = sphi 0, %s85
      %s87 = sphi 0, %s85
      %s88 = sphi 0, %s87
      %s102 = sphi 0, %s88
      %s106 = sphi 0, %s106
      %s108 = sphi 0, %s106
      %s109 = sphi 0, %s108
      %s123 = sphi 0, %s109
      %s127 = sphi 0, %s127
      %s129 = sphi 0, %s127
      %s130 = sphi 0, %s129
      %s144 = sphi 0, %s130
      %s148 = sphi 0, %s148
      %s150 = sphi 0, %s148
      %s151 = sphi 0, %s150
      %s165 = sphi 0, %s151
      %s169 = sphi 0, %s169
      %s171 = sphi 0, %s169
      %s172 = sphi 0, %s171
      %s186 = sphi 0, %s172
      %s190 = sphi 0, %s190
      %s192 = sphi 0, %s190
      %s193 = sphi 0, %s192
      %s207 = sphi 0, %s193
      %s211 = sphi 0, %s211
      %s213 = sphi 0, %s211
      %s214 = sphi 0, %s213
      %s228 = sphi 0, %s214
      %s232 = sphi 0, %s232
      %s234 = sphi 0, %s232
      %s235 = sphi 0, %s234
      %s249 = sphi 0, %s235
      %s253 = sphi 0, %s253
      %s255 = sphi 0, %s253
      %s256 = sphi 0, %s255
      %s270 = sphi 0, %s256
      %s274 = sphi 0, %s274
      %s276 = sphi 0, %s274
      %s277 = sphi 0, %s276
      %s291 = sphi 0, %s277
      %s295 = sphi 0, %s295
      %s297 = sphi 0, %s295
      %s298 = sphi 0, %s297
      %s312 = sphi 0, %s298
      %s316 = sphi 0, %s316
      %s318 = sphi 0, %s316
      %s319 = sphi 0, %s318
      %s333 = sphi 0, %s319
      %s337 = sphi 0, %s337
      %s339 = sphi 0, %s337
      %s340 = sphi 0, %s339
      %s354 = sphi 0, %s340
      %s360 = sphi 0, %s362
      %s363 = sphi 0, %s360
      %s364 = sphi 0, %s363
      %s380 = sphi 0, %s364
    $region4: #{_lambda_.1} parent=1 // loop_header_branch
      %28 = sbr.rel (%p26) target = $region8
    $region5: #{_lambda_.1} parent=1 // loop_body
      %s30 = ssub.s32 %s25, 1
      %s31 = ssub.s32 %s25, 2
      %s32 = sadd.s32 %s25, 1
      %s33 = ssub.s32 %s25, %s32
      %p34 = scmp.eq.s32.totalorder %s33, 0
      %s36 = sadd.s32 %s35, 1
      %s37 = scalar_select %p34, %s35, %s36
      %p40 = pneg %p34
      %p41 = scmp.eq.s32.totalorder %s25, 1
      %p42 = por %p40, %p41
      %p43 = scmp.ne.s32.totalorder %s35, %s38
      %p44 = scmp.eq.s32.totalorder %s25, 0
      %p45 = por %p43, %p44
      %p46 = scmp.ne.s32.totalorder %s35, %s38
      %p47 = scmp.eq.s32.totalorder %s30, 1
      %p48 = por %p46, %p47
      %p49 = scmp.ne.s32.totalorder %s38, %s39
      %p50 = scmp.eq.s32.totalorder %s30, 0
      %p51 = por %p49, %p50
      %p52 = scmp.ne.s32.totalorder %s38, %s39
      %p53 = scmp.eq.s32.totalorder %s31, 1
      %p54 = por %p52, %p53
      %p56 = scmp.ne.s32.totalorder %s39, %s55
      %p57 = scmp.eq.s32.totalorder %s31, 0
      %p58 = por %p56, %p57
      %s59 = ssub.s32 %s25, %s32
      %p60 = scmp.eq.s32.totalorder %s59, 0
      %s62 = sadd.s32 %s61, 1
      %s63 = scalar_select %p60, %s61, %s62
      %p66 = pneg %p60
      %p67 = scmp.eq.s32.totalorder %s25, 1
      %p68 = por %p66, %p67
      %p69 = scmp.ne.s32.totalorder %s61, %s64
      %p70 = scmp.eq.s32.totalorder %s25, 0
      %p71 = por %p69, %p70
      %p72 = scmp.ne.s32.totalorder %s61, %s64
      %p73 = scmp.eq.s32.totalorder %s30, 1
      %p74 = por %p72, %p73
      %p75 = scmp.ne.s32.totalorder %s64, %s65
      %p76 = scmp.eq.s32.totalorder %s30, 0
      %p77 = por %p75, %p76
      %p78 = scmp.ne.s32.totalorder %s64, %s65
      %p79 = scmp.eq.s32.totalorder %s31, 1
      %p80 = por %p78, %p79
      %p82 = scmp.ne.s32.totalorder %s65, %s81
      %p83 = scmp.eq.s32.totalorder %s31, 0
      %p84 = por %p82, %p83
      %s86 = sadd.s32 %s85, 1
      %p89 = scmp.eq.s32.totalorder %s25, 1
      %p90 = scmp.ne.s32.totalorder %s85, %s87
      %p91 = scmp.eq.s32.totalorder %s25, 0
      %p92 = por %p90, %p91
      %p93 = scmp.ne.s32.totalorder %s85, %s87
      %p94 = scmp.eq.s32.totalorder %s30, 1
      %p95 = por %p93, %p94
      %p96 = scmp.ne.s32.totalorder %s87, %s88
      %p97 = scmp.eq.s32.totalorder %s30, 0
      %p98 = por %p96, %p97
      %p99 = scmp.ne.s32.totalorder %s87, %s88
      %p100 = scmp.eq.s32.totalorder %s31, 1
      %p101 = por %p99, %p100
      %p103 = scmp.ne.s32.totalorder %s88, %s102
      %p104 = scmp.eq.s32.totalorder %s31, 0
      %p105 = por %p103, %p104
      %s107 = sadd.s32 %s106, 1
      %p110 = scmp.eq.s32.totalorder %s25, 1
      %p111 = scmp.ne.s32.totalorder %s106, %s108
      %p112 = scmp.eq.s32.totalorder %s25, 0
      %p113 = por %p111, %p112
      %p114 = scmp.ne.s32.totalorder %s106, %s108
      %p115 = scmp.eq.s32.totalorder %s30, 1
      %p116 = por %p114, %p115
      %p117 = scmp.ne.s32.totalorder %s108, %s109
      %p118 = scmp.eq.s32.totalorder %s30, 0
      %p119 = por %p117, %p118
      %p120 = scmp.ne.s32.totalorder %s108, %s109
      %p121 = scmp.eq.s32.totalorder %s31, 1
      %p122 = por %p120, %p121
      %p124 = scmp.ne.s32.totalorder %s109, %s123
      %p125 = scmp.eq.s32.totalorder %s31, 0
      %p126 = por %p124, %p125
      %s128 = sadd.s32 %s127, 1
      %p131 = scmp.eq.s32.totalorder %s25, 1
      %p132 = scmp.ne.s32.totalorder %s127, %s129
      %p133 = scmp.eq.s32.totalorder %s25, 0
      %p134 = por %p132, %p133
      %p135 = scmp.ne.s32.totalorder %s127, %s129
      %p136 = scmp.eq.s32.totalorder %s30, 1
      %p137 = por %p135, %p136
      %p138 = scmp.ne.s32.totalorder %s129, %s130
      %p139 = scmp.eq.s32.totalorder %s30, 0
      %p140 = por %p138, %p139
      %p141 = scmp.ne.s32.totalorder %s129, %s130
      %p142 = scmp.eq.s32.totalorder %s31, 1
      %p143 = por %p141, %p142
      %p145 = scmp.ne.s32.totalorder %s130, %s144
      %p146 = scmp.eq.s32.totalorder %s31, 0
      %p147 = por %p145, %p146
      %s149 = sadd.s32 %s148, 1
      %p152 = scmp.eq.s32.totalorder %s25, 1
      %p153 = scmp.ne.s32.totalorder %s148, %s150
      %p154 = scmp.eq.s32.totalorder %s25, 0
      %p155 = por %p153, %p154
      %p156 = scmp.ne.s32.totalorder %s148, %s150
      %p157 = scmp.eq.s32.totalorder %s30, 1
      %p158 = por %p156, %p157
      %p159 = scmp.ne.s32.totalorder %s150, %s151
      %p160 = scmp.eq.s32.totalorder %s30, 0
      %p161 = por %p159, %p160
      %p162 = scmp.ne.s32.totalorder %s150, %s151
      %p163 = scmp.eq.s32.totalorder %s31, 1
      %p164 = por %p162, %p163
      %p166 = scmp.ne.s32.totalorder %s151, %s165
      %p167 = scmp.eq.s32.totalorder %s31, 0
      %p168 = por %p166, %p167
      %s170 = sadd.s32 %s169, 1
      %p173 = scmp.eq.s32.totalorder %s25, 1
      %p174 = scmp.ne.s32.totalorder %s169, %s171
      %p175 = scmp.eq.s32.totalorder %s25, 0
      %p176 = por %p174, %p175
      %p177 = scmp.ne.s32.totalorder %s169, %s171
      %p178 = scmp.eq.s32.totalorder %s30, 1
      %p179 = por %p177, %p178
      %p180 = scmp.ne.s32.totalorder %s171, %s172
      %p181 = scmp.eq.s32.totalorder %s30, 0
      %p182 = por %p180, %p181
      %p183 = scmp.ne.s32.totalorder %s171, %s172
      %p184 = scmp.eq.s32.totalorder %s31, 1
      %p185 = por %p183, %p184
      %p187 = scmp.ne.s32.totalorder %s172, %s186
      %p188 = scmp.eq.s32.totalorder %s31, 0
      %p189 = por %p187, %p188
      %s191 = sadd.s32 %s190, 1
      %p194 = scmp.eq.s32.totalorder %s25, 1
      %p195 = scmp.ne.s32.totalorder %s190, %s192
      %p196 = scmp.eq.s32.totalorder %s25, 0
      %p197 = por %p195, %p196
      %p198 = scmp.ne.s32.totalorder %s190, %s192
      %p199 = scmp.eq.s32.totalorder %s30, 1
      %p200 = por %p198, %p199
      %p201 = scmp.ne.s32.totalorder %s192, %s193
      %p202 = scmp.eq.s32.totalorder %s30, 0
      %p203 = por %p201, %p202
      %p204 = scmp.ne.s32.totalorder %s192, %s193
      %p205 = scmp.eq.s32.totalorder %s31, 1
      %p206 = por %p204, %p205
      %p208 = scmp.ne.s32.totalorder %s193, %s207
      %p209 = scmp.eq.s32.totalorder %s31, 0
      %p210 = por %p208, %p209
      %s212 = sadd.s32 %s211, 1
      %p215 = scmp.eq.s32.totalorder %s25, 1
      %p216 = scmp.ne.s32.totalorder %s211, %s213
      %p217 = scmp.eq.s32.totalorder %s25, 0
      %p218 = por %p216, %p217
      %p219 = scmp.ne.s32.totalorder %s211, %s213
      %p220 = scmp.eq.s32.totalorder %s30, 1
      %p221 = por %p219, %p220
      %p222 = scmp.ne.s32.totalorder %s213, %s214
      %p223 = scmp.eq.s32.totalorder %s30, 0
      %p224 = por %p222, %p223
      %p225 = scmp.ne.s32.totalorder %s213, %s214
      %p226 = scmp.eq.s32.totalorder %s31, 1
      %p227 = por %p225, %p226
      %p229 = scmp.ne.s32.totalorder %s214, %s228
      %p230 = scmp.eq.s32.totalorder %s31, 0
      %p231 = por %p229, %p230
      %s233 = sadd.s32 %s232, 1
      %p236 = scmp.eq.s32.totalorder %s25, 1
      %p237 = scmp.ne.s32.totalorder %s232, %s234
      %p238 = scmp.eq.s32.totalorder %s25, 0
      %p239 = por %p237, %p238
      %p240 = scmp.ne.s32.totalorder %s232, %s234
      %p241 = scmp.eq.s32.totalorder %s30, 1
      %p242 = por %p240, %p241
      %p243 = scmp.ne.s32.totalorder %s234, %s235
      %p244 = scmp.eq.s32.totalorder %s30, 0
      %p245 = por %p243, %p244
      %p246 = scmp.ne.s32.totalorder %s234, %s235
      %p247 = scmp.eq.s32.totalorder %s31, 1
      %p248 = por %p246, %p247
      %p250 = scmp.ne.s32.totalorder %s235, %s249
      %p251 = scmp.eq.s32.totalorder %s31, 0
      %p252 = por %p250, %p251
      %s254 = sadd.s32 %s253, 1
      %p257 = scmp.eq.s32.totalorder %s25, 1
      %p258 = scmp.ne.s32.totalorder %s253, %s255
      %p259 = scmp.eq.s32.totalorder %s25, 0
      %p260 = por %p258, %p259
      %p261 = scmp.ne.s32.totalorder %s253, %s255
      %p262 = scmp.eq.s32.totalorder %s30, 1
      %p263 = por %p261, %p262
      %p264 = scmp.ne.s32.totalorder %s255, %s256
      %p265 = scmp.eq.s32.totalorder %s30, 0
      %p266 = por %p264, %p265
      %p267 = scmp.ne.s32.totalorder %s255, %s256
      %p268 = scmp.eq.s32.totalorder %s31, 1
      %p269 = por %p267, %p268
      %p271 = scmp.ne.s32.totalorder %s256, %s270
      %p272 = scmp.eq.s32.totalorder %s31, 0
      %p273 = por %p271, %p272
      %s275 = sadd.s32 %s274, 1
      %p278 = scmp.eq.s32.totalorder %s25, 1
      %p279 = scmp.ne.s32.totalorder %s274, %s276
      %p280 = scmp.eq.s32.totalorder %s25, 0
      %p281 = por %p279, %p280
      %p282 = scmp.ne.s32.totalorder %s274, %s276
      %p283 = scmp.eq.s32.totalorder %s30, 1
      %p284 = por %p282, %p283
      %p285 = scmp.ne.s32.totalorder %s276, %s277
      %p286 = scmp.eq.s32.totalorder %s30, 0
      %p287 = por %p285, %p286
      %p288 = scmp.ne.s32.totalorder %s276, %s277
      %p289 = scmp.eq.s32.totalorder %s31, 1
      %p290 = por %p288, %p289
      %p292 = scmp.ne.s32.totalorder %s277, %s291
      %p293 = scmp.eq.s32.totalorder %s31, 0
      %p294 = por %p292, %p293
      %s296 = sadd.s32 %s295, 1
      %p299 = scmp.eq.s32.totalorder %s25, 1
      %p300 = scmp.ne.s32.totalorder %s295, %s297
      %p301 = scmp.eq.s32.totalorder %s25, 0
      %p302 = por %p300, %p301
      %p303 = scmp.ne.s32.totalorder %s295, %s297
      %p304 = scmp.eq.s32.totalorder %s30, 1
      %p305 = por %p303, %p304
      %p306 = scmp.ne.s32.totalorder %s297, %s298
      %p307 = scmp.eq.s32.totalorder %s30, 0
      %p308 = por %p306, %p307
      %p309 = scmp.ne.s32.totalorder %s297, %s298
      %p310 = scmp.eq.s32.totalorder %s31, 1
      %p311 = por %p309, %p310
      %p313 = scmp.ne.s32.totalorder %s298, %s312
      %p314 = scmp.eq.s32.totalorder %s31, 0
      %p315 = por %p313, %p314
      %s317 = sadd.s32 %s316, 1
      %p320 = scmp.eq.s32.totalorder %s25, 1
      %p321 = scmp.ne.s32.totalorder %s316, %s318
      %p322 = scmp.eq.s32.totalorder %s25, 0
      %p323 = por %p321, %p322
      %p324 = scmp.ne.s32.totalorder %s316, %s318
      %p325 = scmp.eq.s32.totalorder %s30, 1
      %p326 = por %p324, %p325
      %p327 = scmp.ne.s32.totalorder %s318, %s319
      %p328 = scmp.eq.s32.totalorder %s30, 0
      %p329 = por %p327, %p328
      %p330 = scmp.ne.s32.totalorder %s318, %s319
      %p331 = scmp.eq.s32.totalorder %s31, 1
      %p332 = por %p330, %p331
      %p334 = scmp.ne.s32.totalorder %s319, %s333
      %p335 = scmp.eq.s32.totalorder %s31, 0
      %p336 = por %p334, %p335
      %s338 = sadd.s32 %s337, 1
      %p341 = scmp.eq.s32.totalorder %s25, 1
      %p342 = scmp.ne.s32.totalorder %s337, %s339
      %p343 = scmp.eq.s32.totalorder %s25, 0
      %p344 = por %p342, %p343
      %p345 = scmp.ne.s32.totalorder %s337, %s339
      %p346 = scmp.eq.s32.totalorder %s30, 1
      %p347 = por %p345, %p346
      %p348 = scmp.ne.s32.totalorder %s339, %s340
      %p349 = scmp.eq.s32.totalorder %s30, 0
      %p350 = por %p348, %p349
      %p351 = scmp.ne.s32.totalorder %s339, %s340
      %p352 = scmp.eq.s32.totalorder %s31, 1
      %p353 = por %p351, %p352
      %p355 = scmp.ne.s32.totalorder %s340, %s354
      %p356 = scmp.eq.s32.totalorder %s31, 0
      %p357 = por %p355, %p356
      %s358 = ssub.s32 %s25, %s32
      %p359 = scmp.eq.s32.totalorder %s358, 0
      %s361 = sadd.s32 %s360, 1
      %s362 = scalar_select %p359, %s360, %s361
      %p365 = pneg %p359
      %p366 = scmp.eq.s32.totalorder %s25, 1
      %p367 = por %p365, %p366
      %p368 = scmp.ne.s32.totalorder %s360, %s363
      %p369 = scmp.eq.s32.totalorder %s25, 0
      %p370 = por %p368, %p369
      %p371 = scmp.ne.s32.totalorder %s360, %s363
      %p372 = scmp.eq.s32.totalorder %s30, 1
      %p373 = por %p371, %p372
      %p374 = scmp.ne.s32.totalorder %s363, %s364
      %p375 = scmp.eq.s32.totalorder %s30, 0
      %p376 = por %p374, %p375
      %p377 = scmp.ne.s32.totalorder %s363, %s364
      %p378 = scmp.eq.s32.totalorder %s31, 1
      %p379 = por %p377, %p378
      %p381 = scmp.ne.s32.totalorder %s364, %s380
      %p382 = scmp.eq.s32.totalorder %s31, 0
      %p383 = por %p381, %p382
      %p384 = scmp.le.s32.totalorder 1, %s25
      %p385 = scmp.lt.s32.totalorder %s25, 3
      %p386 = pnand %p384, %p385
      %p387 = pneg %p386
      // Predicated region
      $region9: #{_lambda_.1} parent=5 // pred_check
        _
      $region10: #{_lambda_.1} parent=5 // pred_check_branch
        %389 = sbr.rel (%p386) target = $region12
      $region11: #{_lambda_.1} parent=5 // pred_region
        %s390 = ssub.s32 %s25, 1
        // Predicated region
        $region13: #{_lambda_.1} parent=11 // pred_check
          %p391 = pneg %p98
        $region14: #{_lambda_.1} parent=11 // pred_check_branch
          %393 = sbr.rel (%p391) target = $region16
        $region15: #{_lambda_.1} parent=11 // pred_region
          _
        $region16: #{_lambda_.1} parent=11 // pred_fallthru
          _
        // Predicated region
        $region17: #{_lambda_.1} parent=11 // pred_check
          %p394 = pneg %p119
        $region18: #{_lambda_.1} parent=11 // pred_check_branch
          %396 = sbr.rel (%p394) target = $region20
        $region19: #{_lambda_.1} parent=11 // pred_region
          _
        $region20: #{_lambda_.1} parent=11 // pred_fallthru
          _
        // Predicated region
        $region21: #{_lambda_.1} parent=11 // pred_check
          %p397 = pneg %p140
        $region22: #{_lambda_.1} parent=11 // pred_check_branch
          %399 = sbr.rel (%p397) target = $region24
        $region23: #{_lambda_.1} parent=11 // pred_region
          _
        $region24: #{_lambda_.1} parent=11 // pred_fallthru
          _
        // Predicated region
        $region25: #{_lambda_.1} parent=11 // pred_check
          %p400 = pneg %p161
        $region26: #{_lambda_.1} parent=11 // pred_check_branch
          %402 = sbr.rel (%p400) target = $region28
        $region27: #{_lambda_.1} parent=11 // pred_region
          _
        $region28: #{_lambda_.1} parent=11 // pred_fallthru
          _
        // Predicated region
        $region29: #{_lambda_.1} parent=11 // pred_check
          %p403 = pneg %p182
        $region30: #{_lambda_.1} parent=11 // pred_check_branch
          %405 = sbr.rel (%p403) target = $region32
        $region31: #{_lambda_.1} parent=11 // pred_region
          _
        $region32: #{_lambda_.1} parent=11 // pred_fallthru
          _
        // Predicated region
        $region33: #{_lambda_.1} parent=11 // pred_check
          %p406 = pneg %p203
        $region34: #{_lambda_.1} parent=11 // pred_check_branch
          %408 = sbr.rel (%p406) target = $region36
        $region35: #{_lambda_.1} parent=11 // pred_region
          _
        $region36: #{_lambda_.1} parent=11 // pred_fallthru
          _
        // Predicated region
        $region37: #{_lambda_.1} parent=11 // pred_check
          %p409 = pneg %p224
        $region38: #{_lambda_.1} parent=11 // pred_check_branch
          %411 = sbr.rel (%p409) target = $region40
        $region39: #{_lambda_.1} parent=11 // pred_region
          _
        $region40: #{_lambda_.1} parent=11 // pred_fallthru
          _
        // Predicated region
        $region41: #{_lambda_.1} parent=11 // pred_check
          %p412 = pneg %p245
        $region42: #{_lambda_.1} parent=11 // pred_check_branch
          %414 = sbr.rel (%p412) target = $region44
        $region43: #{_lambda_.1} parent=11 // pred_region
          _
        $region44: #{_lambda_.1} parent=11 // pred_fallthru
          _
        // Predicated region
        $region45: #{_lambda_.1} parent=11 // pred_check
          %p415 = pneg %p266
        $region46: #{_lambda_.1} parent=11 // pred_check_branch
          %417 = sbr.rel (%p415) target = $region48
        $region47: #{_lambda_.1} parent=11 // pred_region
          _
        $region48: #{_lambda_.1} parent=11 // pred_fallthru
          _
        // Predicated region
        $region49: #{_lambda_.1} parent=11 // pred_check
          %p418 = pneg %p287
        $region50: #{_lambda_.1} parent=11 // pred_check_branch
          %420 = sbr.rel (%p418) target = $region52
        $region51: #{_lambda_.1} parent=11 // pred_region
          _
        $region52: #{_lambda_.1} parent=11 // pred_fallthru
          _
        // Predicated region
        $region53: #{_lambda_.1} parent=11 // pred_check
          %p421 = pneg %p308
        $region54: #{_lambda_.1} parent=11 // pred_check_branch
          %423 = sbr.rel (%p421) target = $region56
        $region55: #{_lambda_.1} parent=11 // pred_region
          _
        $region56: #{_lambda_.1} parent=11 // pred_fallthru
          _
        // Predicated region
        $region57: #{_lambda_.1} parent=11 // pred_check
          %p424 = pneg %p329
        $region58: #{_lambda_.1} parent=11 // pred_check_branch
          %426 = sbr.rel (%p424) target = $region60
        $region59: #{_lambda_.1} parent=11 // pred_region
          _
        $region60: #{_lambda_.1} parent=11 // pred_fallthru
          _
        // Predicated region
        $region61: #{_lambda_.1} parent=11 // pred_check
          %p427 = pneg %p350
        $region62: #{_lambda_.1} parent=11 // pred_check_branch
          %429 = sbr.rel (%p427) target = $region64
        $region63: #{_lambda_.1} parent=11 // pred_region
          _
        $region64: #{_lambda_.1} parent=11 // pred_fallthru
          _
      $region12: #{_lambda_.1} parent=5 // pred_fallthru
        _
      %p430 = scmp.lt.s32.totalorder %s25, 2
      // Predicated region
      $region65: #{_lambda_.1} parent=5 // pred_check
        %p431 = pneg %p430
      $region66: #{_lambda_.1} parent=5 // pred_check_branch
        %433 = sbr.rel (%p431) target = $region68
      $region67: #{_lambda_.1} parent=5 // pred_region
        // Predicated region
        $region69: #{_lambda_.1} parent=67 // pred_check
          %p434 = pneg %p45
        $region70: #{_lambda_.1} parent=67 // pred_check_branch
          %436 = sbr.rel (%p434) target = $region72
        $region71: #{_lambda_.1} parent=67 // pred_region
          %p437 = scmp.lt.s32.totalorder %s25, 1
          %s438 = scalar_select %p437, %s25, 1
          %s439 = smul.addr %s438, 4
          %s440 = scalar_lea.vmem %s0, %s439
        $region72: #{_lambda_.1} parent=67 // pred_fallthru
          _
        // Predicated region
        $region73: #{_lambda_.1} parent=67 // pred_check
          %p441 = pneg %p71
        $region74: #{_lambda_.1} parent=67 // pred_check_branch
          %443 = sbr.rel (%p441) target = $region76
        $region75: #{_lambda_.1} parent=67 // pred_region
          %s444 = sand.u32 %s61, 1
          %s445 = sand.u32 %s61, 1
          %s446 = smul.addr %s445, 16
          %s447 = scalar_lea.vmem [#allocation4], %s446
          %s448 = smul.addr %s25, 4
          %s449 = scalar_lea.vmem %s1, %s448
          // Predicated region
          $region77: #{_lambda_.1} parent=75 // pred_check
            _
          $region78: #{_lambda_.1} parent=75 // pred_check_branch
            %451 = sbr.rel (0) target = $region80
          $region79: #{_lambda_.1} parent=75 // pred_region
            // Predicated region
            $region81: #{_lambda_.1} parent=79 // pred_check
              _
            $region82: #{_lambda_.1} parent=79 // pred_check_branch
              %453 = sbr.rel target = $region84
            $region83: #{_lambda_.1} parent=79 // pred_region
              // Predicated region
              $region96: #{_lambda_.1} parent=83 // pred_check
                _
              $region97: #{_lambda_.1} parent=83 // pred_check_branch
                %474 = sbr.rel (0) target = $region99
              $region98: #{_lambda_.1} parent=83 // pred_region
                loop: start=0, step=1, limit=1
                $region100: #{_lambda_.1} parent=98 // loop_pre_header
                  _
                $region101: #{_lambda_.1} parent=98 // loop_header
                  %s476 = sphi 0, %s480
                  %p477 = scmp.ge.s32.totalorder %s476, 1
                  %s481 = sphi %s449, %s449
                  %s482 = sphi %s447, %s447
                $region102: #{_lambda_.1} parent=98 // loop_header_branch
                  %479 = sbr.rel (%p477) target = $region106
                $region103: #{_lambda_.1} parent=98 // loop_body
                  _
                $region104: #{_lambda_.1} parent=98 // loop_footer
                  %s480 = sadd.s32 1, %s476
                $region105: #{_lambda_.1} parent=98 // loop_footer_branch
                  %475 = sbr.rel target = $region101
                $region106: #{_lambda_.1} parent=98 // loop_exit
                  _
                loop: start=0, step=1, limit=1
                $region107: #{_lambda_.1} parent=98 // loop_pre_header
                  _
                $region108: #{_lambda_.1} parent=98 // loop_header
                  %s485 = sphi 0, %s489
                  %p486 = scmp.ge.s32.totalorder %s485, 1
                  %s490 = sphi %s449, %s449
                  %s491 = sphi %s447, %s447
                $region109: #{_lambda_.1} parent=98 // loop_header_branch
                  %488 = sbr.rel (%p486) target = $region113
                $region110: #{_lambda_.1} parent=98 // loop_body
                  %v492 = vld [vmem:[%s490] sm:$0xf]
                  %493 = vst [vmem:[%s491] sm:$0xf] %v492
                  %v494 = vld [vmem:[%s490 + $0x8] sm:$0xf]
                  %495 = vst [vmem:[%s491 + $0x4] sm:$0xf] %v494
                  %v496 = vld [vmem:[%s490 + $0x10] sm:$0xf]
                  %497 = vst [vmem:[%s491 + $0x8] sm:$0xf] %v496
                  %v498 = vld [vmem:[%s490 + $0x18] sm:$0xf]
                  %499 = vst [vmem:[%s491 + $0xc] sm:$0xf] %v498
                $region111: #{_lambda_.1} parent=98 // loop_footer
                  %s489 = sadd.s32 1, %s485
                $region112: #{_lambda_.1} parent=98 // loop_footer_branch
                  %484 = sbr.rel target = $region108
                $region113: #{_lambda_.1} parent=98 // loop_exit
                  _
              $region99: #{_lambda_.1} parent=83 // pred_fallthru
                _
            $region84: #{_lambda_.1} parent=79 // pred_fallthru
              _
            // Predicated region
            $region85: #{_lambda_.1} parent=79 // pred_check
              _
            $region86: #{_lambda_.1} parent=79 // pred_check_branch
              %455 = sbr.rel (0) target = $region88
            $region87: #{_lambda_.1} parent=79 // pred_region
              loop: start=0, step=1, limit=1
              $region89: #{_lambda_.1} parent=87 // loop_pre_header
                _
              $region90: #{_lambda_.1} parent=87 // loop_header
                %s458 = sphi 0, %s462
                %p459 = scmp.ge.s32.totalorder %s458, 1
                %s463 = sphi %s449, %s449
                %s464 = sphi %s447, %s447
              $region91: #{_lambda_.1} parent=87 // loop_header_branch
                %461 = sbr.rel (%p459) target = $region95
              $region92: #{_lambda_.1} parent=87 // loop_body
                %v465 = vld [vmem:[%s463] sm:$0xf]
                %466 = vst [vmem:[%s464] sm:$0xf] %v465
                %v467 = vld [vmem:[%s463 + $0x8] sm:$0xf]
                %468 = vst [vmem:[%s464 + $0x4] sm:$0xf] %v467
                %v469 = vld [vmem:[%s463 + $0x10] sm:$0xf]
                %470 = vst [vmem:[%s464 + $0x8] sm:$0xf] %v469
                %v471 = vld [vmem:[%s463 + $0x18] sm:$0xf]
                %472 = vst [vmem:[%s464 + $0xc] sm:$0xf] %v471
              $region93: #{_lambda_.1} parent=87 // loop_footer
                %s462 = sadd.s32 1, %s458
              $region94: #{_lambda_.1} parent=87 // loop_footer_branch
                %457 = sbr.rel target = $region90
              $region95: #{_lambda_.1} parent=87 // loop_exit
                _
            $region88: #{_lambda_.1} parent=79 // pred_fallthru
              _
          $region80: #{_lambda_.1} parent=75 // pred_fallthru
            _
          %500 = vnop
        $region76: #{_lambda_.1} parent=67 // pred_fallthru
          _
      $region68: #{_lambda_.1} parent=5 // pred_fallthru
        _
      %p501 = scmp.le.s32.totalorder 1, %s25
      %p502 = scmp.lt.s32.totalorder %s25, 3
      %p503 = pnand %p501, %p502
      %p504 = pneg %p503
      // Predicated region
      $region114: #{_lambda_.1} parent=5 // pred_check
        _
      $region115: #{_lambda_.1} parent=5 // pred_check_branch
        %506 = sbr.rel (%p503) target = $region117
      $region116: #{_lambda_.1} parent=5 // pred_region
        %s507 = ssub.s32 %s25, 1
        %s508 = sand.u32 %s64, 1
        %s509 = sand.u32 %s64, 1
        %s510 = smul.addr %s509, 16
        %s511 = scalar_lea.vmem [#allocation4], %s510
        // Predicated region
        $region118: #{_lambda_.1} parent=116 // pred_check
          %p512 = pneg %p77
        $region119: #{_lambda_.1} parent=116 // pred_check_branch
          %514 = sbr.rel (%p512) target = $region121
        $region120: #{_lambda_.1} parent=116 // pred_region
          _
        $region121: #{_lambda_.1} parent=116 // pred_fallthru
          _
        %p515 = scmp.lt.s32.totalorder %s30, 1
        %s516 = scalar_select %p515, %s30, 1
        %s517 = smul.addr %s516, 4
        %s518 = scalar_lea.vmem %s0, %s517
        %p519 = pneg %p51
        %p520 = pneg %p48
        %s521 = sand.u32 %s64, 1
        %s522 = sand.u32 %s64, 1
        %s523 = smul.addr %s522, 16
        %s524 = scalar_lea.vmem [#allocation4], %s523
        %p525 = pneg %p77
        %p526 = pneg %p74
        %p527 = pneg %p98
        %p528 = pneg %p95
        %p529 = pneg %p119
        %p530 = pneg %p116
        %p531 = pneg %p140
        %p532 = pneg %p137
        %p533 = pneg %p161
        %p534 = pneg %p158
        %p535 = pneg %p182
        %p536 = pneg %p179
        %p537 = pneg %p203
        %p538 = pneg %p200
        %p539 = pneg %p224
        %p540 = pneg %p221
        %p541 = pneg %p245
        %p542 = pneg %p242
        %p543 = pneg %p266
        %p544 = pneg %p263
        %p545 = pneg %p287
        %p546 = pneg %p284
        %p547 = pneg %p308
        %p548 = pneg %p305
        %p549 = pneg %p329
        %p550 = pneg %p326
        %p551 = pneg %p350
        %p552 = pneg %p347
        %p553 = pneg %p376
        %p554 = pneg %p373
        %p555 = scmp.lt.s32.totalorder %s30, 1
        %s556 = scalar_select %p555, %s30, 1
        %s557 = scalar_lea.vmem %s15, %s556
        %p558 = scmp.lt.s32.totalorder %s30, 1
        %s559 = scalar_select %p558, %s30, 1
        %s560 = smul.addr %s559, 4
        %s561 = scalar_lea.vmem %s0, %s560
        %p562 = scmp.lt.s32.totalorder %s30, 1
        %s563 = scalar_select %p562, %s30, 1
        %s564 = scalar_lea.vmem %s15, %s563
        %v566 = vld [vmem:[%s561] sm:$0x7]
        %v567 = vmul.f32 %v566, %v566
        %v569 = vrot.slane %v567, 1
        %v571 = vadd.f32 %v567, %v569
        %v572 = vrot.slane %v567, 2
        %v574 = vadd.f32 %v571, %v572
        %v575 = vrsqrt.pop %v574
        %v576 = vmul.f32 %v574, %v575
        %vm577 = vcmp.eq.f32.partialorder %v574, inf
        %v578 = vsel %vm577, %v574, %v576
        %vm579 = vcmp.eq.f32.partialorder %v574, 0.0
        %v580 = vand.u32 %v574, 2147483648
        %v581 = vsel %vm579, %v580, %v578
        %v582 = vadd.f32 %v581, 1e-08
        %v583 = vrcp.pop %v582
        %v584 = vlaneseq
        %v585 = vshrl.u32 %v584, 7
        %v586 = vsub.s32 0, %v585
        %v587 = vrot.slane %v583, %v586
        %v588 = vmul.f32 %v566, %v587
        %v589 = vld [vmem:[%s3] sm:$0xf]
        %v590 = vld [vmem:[%s3 + $0x4] sm:$0xf]
        %v591 = vpack.c.bf16 %v588, %v588
        %v592 = vld [vmem:[%s2] sm:$0xff]
        %v593 = vld [vmem:[%s2 + $0x8] sm:$0xff]
        %595 = vset.pattern.permute.xlu0 0
        %596 = vperm.xlu0 %595, %v592
        %v597 = vpop.permute.xlu0 %596
        %600 = vset.pattern.permute.xlu0 0
        %601 = vperm.xlu0 %600, %v593
        %v602 = vpop.permute.xlu0 %601
        %v604 = vlaneseq
        %v605 = vshrl.u32 %v604, 7
        %v606 = vsub.s32 0, %v605
        %v607 = vrot.slane %v581, %v606
        %v608 = vmul.f32 %v597, %v607
        %v609 = vmul.f32 %v602, %v607
        %v612 = vunpack.c.l.b16 %v589
        %v613 = vunpack.c.l.b16 %v590
        %v614 = vpack.c.b16 %v613, %v612
        %vm615 = vcmask 23552
        %v617 = vsel %vm615, %v614, 0
        %vm619 = vcmask 1040384
        %vm620 = vcmask 1041408
        %v621 = vsel %vm619, 4294967295, 65535
        %v622 = vsel %vm620, %v621, 0
        %v624 = vand.u32 %v591, %v622
        %626 = vmatprep.subr.bf16.mxu0 0
        %627 = vmatpush1.bf16.msra.mxu0 %v624
        %628 = vmatprep.subr.bf16.mxu0 0
        %629 = vmatpush1.bf16.msra.mxu0 0
        %630 = vmatprep.subr.bf16.mxu0 0
        %631 = vmatpush1.bf16.msra.mxu0 0
        %632 = vmatprep.subr.bf16.mxu0 0
        %633 = vmatpush1.bf16.msra.mxu0 0
        %634 = vmatprep.subr.bf16.mxu0 0
        %635 = vmatpush1.bf16.msra.mxu0 0
        %636 = vmatprep.subr.bf16.mxu0 0
        %637 = vmatpush1.bf16.msra.mxu0 0
        %638 = vmatprep.subr.bf16.mxu0 0
        %639 = vmatpush1.bf16.msra.mxu0 0
        %640 = vmatprep.subr.bf16.mxu0 0
        %641 = vmatpush1.bf16.msra.mxu0 0
        %642 = vmatprep.subr.bf16.mxu0 0
        %643 = vmatpush1.bf16.msra.mxu0 0
        %644 = vmatprep.subr.bf16.mxu0 0
        %645 = vmatpush1.bf16.msra.mxu0 0
        %646 = vmatprep.subr.bf16.mxu0 0
        %647 = vmatpush1.bf16.msra.mxu0 0
        %648 = vmatprep.subr.bf16.mxu0 0
        %649 = vmatpush1.bf16.msra.mxu0 0
        %650 = vmatprep.subr.bf16.mxu0 0
        %651 = vmatpush1.bf16.msra.mxu0 0
        %652 = vmatprep.subr.bf16.mxu0 0
        %653 = vmatpush1.bf16.msra.mxu0 0
        %654 = vmatprep.subr.bf16.mxu0 0
        %655 = vmatpush1.bf16.msra.mxu0 0
        %656 = vmatprep.subr.bf16.mxu0 0
        %657 = vmatpush1.bf16.msra.mxu0 0
        %658 = vmatprep.mubr.bf16.mxu0 0
        %659 = vmatmul.mubr.bf16.gmra.mrb[0].mxu0 %v617
        %v660 = vpop.f32.mrb[0].mxu0
        %v661 = vadd.f32 %v608, %v660
        %v662 = vpop.f32.mrb[0].mxu0
        %v663 = vpop.f32.mrb[0].mxu0
        %v664 = vadd.f32 %v609, %v663
        %v665 = vpop.f32.mrb[0].mxu0
        %666 = vdwg.mxu0
        %v667 = vld [vmem:[%s4] sm:$0xff]
        %v668 = vld [vmem:[%s4 + $0x8] sm:$0xff]
        %670 = vset.pattern.permute.xlu0 0
        %671 = vperm.xlu0 %670, %v667
        %v672 = vpop.permute.xlu0 %671
        %675 = vset.pattern.permute.xlu0 0
        %676 = vperm.xlu0 %675, %v668
        %v677 = vpop.permute.xlu0 %676
        %v679 = vadd.f32 %v661, %v672
        %v680 = vadd.f32 %v664, %v677
        %v681 = vmax.f32 %v679, 0.0
        %v682 = vmax.f32 %v680, 0.0
        %v683 = vld [vmem:[%s5] sm:$0xf]
        %v684 = vld [vmem:[%s5 + $0x4] sm:$0xf]
        %v685 = vld [vmem:[%s5 + $0x8] sm:$0xf]
        %v686 = vld [vmem:[%s5 + $0xc] sm:$0xf]
        %v687 = vpack.c.bf16 %v682, %v681
        %v688 = vld [vmem:[%s6] sm:$0xff]
        %v689 = vld [vmem:[%s6 + $0x8] sm:$0xff]
        %v690 = vld [vmem:[%s6 + $0x10] sm:$0xff]
        %v691 = vld [vmem:[%s6 + $0x18] sm:$0xff]
        %693 = vset.pattern.permute.xlu0 0
        %694 = vperm.xlu0 %693, %v688
        %v695 = vpop.permute.xlu0 %694
        %698 = vset.pattern.permute.xlu0 0
        %699 = vperm.xlu0 %698, %v689
        %v700 = vpop.permute.xlu0 %699
        %703 = vset.pattern.permute.xlu0 0
        %704 = vperm.xlu0 %703, %v690
        %v705 = vpop.permute.xlu0 %704
        %708 = vset.pattern.permute.xlu0 0
        %709 = vperm.xlu0 %708, %v691
        %v710 = vpop.permute.xlu0 %709
        %v716 = vunpack.c.l.b16 %v683
        %v717 = vunpack.c.l.b16 %v684
        %v718 = vunpack.c.l.b16 %v685
        %v719 = vunpack.c.l.b16 %v686
        %v720 = vpack.c.b16 %v717, %v716
        %v721 = vpack.c.b16 %v719, %v718
        %vm722 = vcmask 130048
        %v724 = vsel %vm722, %v720, 0
        %v727 = vsel %vm722, %v721, 0
        %729 = vmatprep.subr.bf16.mxu0 0
        %730 = vmatpush1.bf16.msra.mxu0 %v687
        %731 = vmatprep.subr.bf16.mxu0 0
        %732 = vmatpush1.bf16.msra.mxu0 0
        %733 = vmatprep.subr.bf16.mxu0 0
        %734 = vmatpush1.bf16.msra.mxu0 0
        %735 = vmatprep.subr.bf16.mxu0 0
        %736 = vmatpush1.bf16.msra.mxu0 0
        %737 = vmatprep.subr.bf16.mxu0 0
        %738 = vmatpush1.bf16.msra.mxu0 0
        %739 = vmatprep.subr.bf16.mxu0 0
        %740 = vmatpush1.bf16.msra.mxu0 0
        %741 = vmatprep.subr.bf16.mxu0 0
        %742 = vmatpush1.bf16.msra.mxu0 0
        %743 = vmatprep.subr.bf16.mxu0 0
        %744 = vmatpush1.bf16.msra.mxu0 0
        %745 = vmatprep.subr.bf16.mxu0 0
        %746 = vmatpush1.bf16.msra.mxu0 0
        %747 = vmatprep.subr.bf16.mxu0 0
        %748 = vmatpush1.bf16.msra.mxu0 0
        %749 = vmatprep.subr.bf16.mxu0 0
        %750 = vmatpush1.bf16.msra.mxu0 0
        %751 = vmatprep.subr.bf16.mxu0 0
        %752 = vmatpush1.bf16.msra.mxu0 0
        %753 = vmatprep.subr.bf16.mxu0 0
        %754 = vmatpush1.bf16.msra.mxu0 0
        %755 = vmatprep.subr.bf16.mxu0 0
        %756 = vmatpush1.bf16.msra.mxu0 0
        %757 = vmatprep.subr.bf16.mxu0 0
        %758 = vmatpush1.bf16.msra.mxu0 0
        %759 = vmatprep.subr.bf16.mxu0 0
        %760 = vmatpush1.bf16.msra.mxu0 0
        %761 = vmatprep.mubr.bf16.mxu0 0
        %762 = vmatmul.mubr.bf16.gmra.mrb[0].mxu0 %v724
        %v763 = vpop.f32.mrb[0].mxu0
        %v764 = vadd.f32 %v695, %v763
        %v765 = vpop.f32.mrb[0].mxu0
        %v766 = vpop.f32.mrb[0].mxu0
        %v767 = vadd.f32 %v700, %v766
        %v768 = vpop.f32.mrb[0].mxu0
        %769 = vmatprep.mubr.bf16.mxu0 0
        %770 = vmatmul.mubr.bf16.gmra.mrb[0].mxu0 %v727
        %v771 = vpop.f32.mrb[0].mxu0
        %v772 = vadd.f32 %v705, %v771
        %v773 = vpop.f32.mrb[0].mxu0
        %v774 = vpop.f32.mrb[0].mxu0
        %v775 = vadd.f32 %v710, %v774
        %v776 = vpop.f32.mrb[0].mxu0
        %777 = vdwg.mxu0
        %v778 = vmax.f32 %v764, 0.0
        %v779 = vmax.f32 %v767, 0.0
        %v780 = vmax.f32 %v772, 0.0
        %v781 = vmax.f32 %v775, 0.0
        %v782 = vld [vmem:[%s7] sm:$0xf]
        %v783 = vld [vmem:[%s7 + $0x4] sm:$0xf]
        %v784 = vpack.c.bf16 %v779, %v778
        %v785 = vpack.c.bf16 %v781, %v780
        %v786 = vld [vmem:[%s8] sm:$0xff]
        %v787 = vld [vmem:[%s8 + $0x8] sm:$0xff]
        %789 = vset.pattern.permute.xlu0 0
        %790 = vperm.xlu0 %789, %v786
        %v791 = vpop.permute.xlu0 %790
        %794 = vset.pattern.permute.xlu0 0
        %795 = vperm.xlu0 %794, %v787
        %v796 = vpop.permute.xlu0 %795
        %v800 = vunpack.c.l.b16 %v782
        %v801 = vunpack.c.l.b16 %v783
        %v802 = vpack.c.b16 %v801, %v800
        %vm803 = vcmask 261120
        %v805 = vsel %vm803, %v802, 0
        %807 = vmatprep.subr.bf16.mxu0 0
        %808 = vmatpush1.bf16.msra.mxu0 %v784
        %809 = vmatprep.subr.bf16.mxu0 0
        %810 = vmatpush1.bf16.msra.mxu0 %v785
        %811 = vmatprep.subr.bf16.mxu0 0
        %812 = vmatpush1.bf16.msra.mxu0 0
        %813 = vmatprep.subr.bf16.mxu0 0
        %814 = vmatpush1.bf16.msra.mxu0 0
        %815 = vmatprep.subr.bf16.mxu0 0
        %816 = vmatpush1.bf16.msra.mxu0 0
        %817 = vmatprep.subr.bf16.mxu0 0
        %818 = vmatpush1.bf16.msra.mxu0 0
        %819 = vmatprep.subr.bf16.mxu0 0
        %820 = vmatpush1.bf16.msra.mxu0 0
        %821 = vmatprep.subr.bf16.mxu0 0
        %822 = vmatpush1.bf16.msra.mxu0 0
        %823 = vmatprep.subr.bf16.mxu0 0
        %824 = vmatpush1.bf16.msra.mxu0 0
        %825 = vmatprep.subr.bf16.mxu0 0
        %826 = vmatpush1.bf16.msra.mxu0 0
        %827 = vmatprep.subr.bf16.mxu0 0
        %828 = vmatpush1.bf16.msra.mxu0 0
        %829 = vmatprep.subr.bf16.mxu0 0
        %830 = vmatpush1.bf16.msra.mxu0 0
        %831 = vmatprep.subr.bf16.mxu0 0
        %832 = vmatpush1.bf16.msra.mxu0 0
        %833 = vmatprep.subr.bf16.mxu0 0
        %834 = vmatpush1.bf16.msra.mxu0 0
        %835 = vmatprep.subr.bf16.mxu0 0
        %836 = vmatpush1.bf16.msra.mxu0 0
        %837 = vmatprep.subr.bf16.mxu0 0
        %838 = vmatpush1.bf16.msra.mxu0 0
        %839 = vmatprep.mubr.bf16.mxu0 0
        %840 = vmatmul.mubr.bf16.gmra.mrb[0].mxu0 %v805
        %v841 = vpop.f32.mrb[0].mxu0
        %v842 = vadd.f32 %v791, %v841
        %v843 = vpop.f32.mrb[0].mxu0
        %v844 = vpop.f32.mrb[0].mxu0
        %v845 = vadd.f32 %v796, %v844
        %v846 = vpop.f32.mrb[0].mxu0
        %847 = vdwg.mxu0
        %v848 = vmax.f32 %v842, 0.0
        %v849 = vmax.f32 %v845, 0.0
        %v850 = vld [vmem:[%s9] sm:$0x1]
        %v851 = vpack.c.bf16 %v849, %v848
        %v852 = vld [vmem:[#allocation2] sm:$0x1]
        %854 = vset.pattern.permute.xlu0 0
        %855 = vperm.xlu0 %854, %v852
        %v856 = vpop.permute.xlu0 %855
        %v858 = vlaneseq
        %v859 = vshrl.u32 %v858, 7
        %v860 = vsub.s32 0, %v859
        %v861 = vrot.slane %v856, %v860
        %v863 = vsel %vm722, %v850, 0
        %865 = vmatprep.subr.bf16.mxu0 0
        %866 = vmatpush1.bf16.msra.mxu0 %v851
        %867 = vmatprep.subr.bf16.mxu0 0
        %868 = vmatpush1.bf16.msra.mxu0 0
        %869 = vmatprep.subr.bf16.mxu0 0
        %870 = vmatpush1.bf16.msra.mxu0 0
        %871 = vmatprep.subr.bf16.mxu0 0
        %872 = vmatpush1.bf16.msra.mxu0 0
        %873 = vmatprep.subr.bf16.mxu0 0
        %874 = vmatpush1.bf16.msra.mxu0 0
        %875 = vmatprep.subr.bf16.mxu0 0
        %876 = vmatpush1.bf16.msra.mxu0 0
        %877 = vmatprep.subr.bf16.mxu0 0
        %878 = vmatpush1.bf16.msra.mxu0 0
        %879 = vmatprep.subr.bf16.mxu0 0
        %880 = vmatpush1.bf16.msra.mxu0 0
        %881 = vmatprep.subr.bf16.mxu0 0
        %882 = vmatpush1.bf16.msra.mxu0 0
        %883 = vmatprep.subr.bf16.mxu0 0
        %884 = vmatpush1.bf16.msra.mxu0 0
        %885 = vmatprep.subr.bf16.mxu0 0
        %886 = vmatpush1.bf16.msra.mxu0 0
        %887 = vmatprep.subr.bf16.mxu0 0
        %888 = vmatpush1.bf16.msra.mxu0 0
        %889 = vmatprep.subr.bf16.mxu0 0
        %890 = vmatpush1.bf16.msra.mxu0 0
        %891 = vmatprep.subr.bf16.mxu0 0
        %892 = vmatpush1.bf16.msra.mxu0 0
        %893 = vmatprep.subr.bf16.mxu0 0
        %894 = vmatpush1.bf16.msra.mxu0 0
        %895 = vmatprep.subr.bf16.mxu0 0
        %896 = vmatpush1.bf16.msra.mxu0 0
        %897 = vmatprep.mubr.bf16.mxu0 0
        %898 = vmatmul.mubr.bf16.gmra.mrb[0].mxu0 %v863
        %v899 = vpop.f32.mrb[0].mxu0
        %v900 = vadd.f32 %v861, %v899
        %v901 = vpop.f32.mrb[0].mxu0
        %v902 = vpop.f32.mrb[0].mxu0
        %v903 = vpop.f32.mrb[0].mxu0
        %904 = vdwg.mxu0
        %v905 = vld [vmem:[%s511] sm:$0xf]
        %v906 = vld [vmem:[%s511 + $0x4] sm:$0xf]
        %v907 = vld [vmem:[%s511 + $0x8] sm:$0xf]
        %v908 = vld [vmem:[%s511 + $0xc] sm:$0xf]
        %v909 = vunpack.c.l.bf16 %v905
        %v910 = vunpack.c.l.bf16 %v906
        %v911 = vunpack.c.l.bf16 %v907
        %v912 = vunpack.c.l.bf16 %v908
        %v913 = vld [vmem:[%s11] sm:$0xff]
        %v914 = vld [vmem:[%s11 + $0x8] sm:$0xff]
        %v915 = vld [vmem:[%s11 + $0x10] sm:$0xff]
        %v916 = vld [vmem:[%s11 + $0x18] sm:$0xff]
        %918 = vset.pattern.permute.xlu0 0
        %919 = vperm.xlu0 %918, %v913
        %v920 = vpop.permute.xlu0 %919
        %923 = vset.pattern.permute.xlu0 0
        %924 = vperm.xlu0 %923, %v914
        %v925 = vpop.permute.xlu0 %924
        %928 = vset.pattern.permute.xlu0 0
        %929 = vperm.xlu0 %928, %v915
        %v930 = vpop.permute.xlu0 %929
        %933 = vset.pattern.permute.xlu0 0
        %934 = vperm.xlu0 %933, %v916
        %v935 = vpop.permute.xlu0 %934
        %v937 = vlaneseq
        %v938 = vshrl.u32 %v937, 7
        %v939 = vsub.s32 0, %v938
        %v940 = vrot.slane %v900, %v939
        %v941 = vmul.f32 %v920, %v940
        %v942 = vmul.f32 %v925, %v940
        %v943 = vmul.f32 %v930, %v940
        %v944 = vmul.f32 %v935, %v940
        %v945 = vadd.f32 %v909, %v941
        %v946 = vadd.f32 %v910, %v942
        %v947 = vadd.f32 %v911, %v943
        %v948 = vadd.f32 %v912, %v944
        %v949 = vld [vmem:[%s12] sm:$0xff]
        %v950 = vld [vmem:[%s12 + $0x8] sm:$0xff]
        %v951 = vld [vmem:[%s12 + $0x10] sm:$0xff]
        %v952 = vld [vmem:[%s12 + $0x18] sm:$0xff]
        %954 = vset.pattern.permute.xlu0 0
        %955 = vperm.xlu0 %954, %v949
        %v956 = vpop.permute.xlu0 %955
        %959 = vset.pattern.permute.xlu0 0
        %960 = vperm.xlu0 %959, %v950
        %v961 = vpop.permute.xlu0 %960
        %964 = vset.pattern.permute.xlu0 0
        %965 = vperm.xlu0 %964, %v951
        %v966 = vpop.permute.xlu0 %965
        %969 = vset.pattern.permute.xlu0 0
        %970 = vperm.xlu0 %969, %v952
        %v971 = vpop.permute.xlu0 %970
        %v973 = vadd.f32 %v945, %v956
        %v974 = vadd.f32 %v946, %v961
        %v975 = vadd.f32 %v947, %v966
        %v976 = vadd.f32 %v948, %v971
        %v977 = vmax.f32 %v973, 0.0
        %v978 = vmax.f32 %v974, 0.0
        %v979 = vmax.f32 %v975, 0.0
        %v980 = vmax.f32 %v976, 0.0
        %v981 = vld [vmem:[%s13] sm:$0x1]
        %v982 = vpack.c.bf16 %v978, %v977
        %v983 = vpack.c.bf16 %v980, %v979
        %v984 = vld [vmem:[#allocation3] sm:$0x1]
        %986 = vset.pattern.permute.xlu0 0
        %987 = vperm.xlu0 %986, %v984
        %v988 = vpop.permute.xlu0 %987
        %v990 = vlaneseq
        %v991 = vshrl.u32 %v990, 7
        %v992 = vsub.s32 0, %v991
        %v993 = vrot.slane %v988, %v992
        %v995 = vsel %vm803, %v981, 0
        %997 = vmatprep.subr.bf16.mxu0 0
        %998 = vmatpush1.bf16.msra.mxu0 %v982
        %999 = vmatprep.subr.bf16.mxu0 0
        %1000 = vmatpush1.bf16.msra.mxu0 %v983
        %1001 = vmatprep.subr.bf16.mxu0 0
        %1002 = vmatpush1.bf16.msra.mxu0 0
        %1003 = vmatprep.subr.bf16.mxu0 0
        %1004 = vmatpush1.bf16.msra.mxu0 0
        %1005 = vmatprep.subr.bf16.mxu0 0
        %1006 = vmatpush1.bf16.msra.mxu0 0
        %1007 = vmatprep.subr.bf16.mxu0 0
        %1008 = vmatpush1.bf16.msra.mxu0 0
        %1009 = vmatprep.subr.bf16.mxu0 0
        %1010 = vmatpush1.bf16.msra.mxu0 0
        %1011 = vmatprep.subr.bf16.mxu0 0
        %1012 = vmatpush1.bf16.msra.mxu0 0
        %1013 = vmatprep.subr.bf16.mxu0 0
        %1014 = vmatpush1.bf16.msra.mxu0 0
        %1015 = vmatprep.subr.bf16.mxu0 0
        %1016 = vmatpush1.bf16.msra.mxu0 0
        %1017 = vmatprep.subr.bf16.mxu0 0
        %1018 = vmatpush1.bf16.msra.mxu0 0
        %1019 = vmatprep.subr.bf16.mxu0 0
        %1020 = vmatpush1.bf16.msra.mxu0 0
        %1021 = vmatprep.subr.bf16.mxu0 0
        %1022 = vmatpush1.bf16.msra.mxu0 0
        %1023 = vmatprep.subr.bf16.mxu0 0
        %1024 = vmatpush1.bf16.msra.mxu0 0
        %1025 = vmatprep.subr.bf16.mxu0 0
        %1026 = vmatpush1.bf16.msra.mxu0 0
        %1027 = vmatprep.subr.bf16.mxu0 0
        %1028 = vmatpush1.bf16.msra.mxu0 0
        %1029 = vmatprep.mubr.bf16.mxu0 0
        %1030 = vmatmul.mubr.bf16.gmra.mrb[0].mxu0 %v995
        %v1031 = vpop.f32.mrb[0].mxu0
        %v1032 = vadd.f32 %v993, %v1031
        %v1033 = vpop.f32.mrb[0].mxu0
        %v1034 = vpop.f32.mrb[0].mxu0
        %v1035 = vpop.f32.mrb[0].mxu0
        %1036 = vdwg.mxu0
        %1037 = vst [vmem:[%s564] sm:$0x1] %v1032
        %p1038 = scmp.lt.s32.totalorder %s30, 1
        %s1039 = scalar_select %p1038, %s30, 1
        %s1040 = scalar_lea.vmem %s15, %s1039
        // Predicated region
        $region122: #{_lambda_.1} parent=116 // pred_check
          %p1041 = pneg %p373
        $region123: #{_lambda_.1} parent=116 // pred_check_branch
          %1043 = sbr.rel (%p1041) target = $region125
        $region124: #{_lambda_.1} parent=116 // pred_region
          _
        $region125: #{_lambda_.1} parent=116 // pred_fallthru
          _
      $region117: #{_lambda_.1} parent=5 // pred_fallthru
        _
      %p1044 = scmp.le.s32.totalorder 2, %s25
      // Predicated region
      $region126: #{_lambda_.1} parent=5 // pred_check
        %p1045 = pneg %p1044
      $region127: #{_lambda_.1} parent=5 // pred_check_branch
        %1047 = sbr.rel (%p1045) target = $region129
      $region128: #{_lambda_.1} parent=5 // pred_region
        %s1048 = ssub.s32 %s25, 2
        // Predicated region
        $region130: #{_lambda_.1} parent=128 // pred_check
          %p1049 = pneg %p379
        $region131: #{_lambda_.1} parent=128 // pred_check_branch
          %1051 = sbr.rel (%p1049) target = $region133
        $region132: #{_lambda_.1} parent=128 // pred_region
          %p1052 = scmp.lt.s32.totalorder %s31, 1
          %s1053 = scalar_select %p1052, %s31, 1
          %s1054 = scalar_lea.vmem %s15, %s1053
        $region133: #{_lambda_.1} parent=128 // pred_fallthru
          _
      $region129: #{_lambda_.1} parent=5 // pred_fallthru
        _
    $region6: #{_lambda_.1} parent=1 // loop_footer
      %s29 = sadd.s32 1, %s25
    $region7: #{_lambda_.1} parent=1 // loop_footer_branch
      %24 = sbr.rel target = $region3
    $region8: #{_lambda_.1} parent=1 // loop_exit
      _

</llo_original>
